<compile_context>
chip_gen: v7x
topology: tpu7x:2x2x1
jax: 0.10.0
libtpu: 0.0.40
codegen_flags: <defaults>
</compile_context>

<pallas_src>
import functools

import jax
import jax.numpy as jnp
from jax import lax
from jax.experimental import pallas as pl
from jax.experimental.pallas import tpu as pltpu


# Second-minor block granularity per element size (sublane packing).
_SUBLANE = {4: 8, 2: 16, 1: 32}
_LANE = 128
_DENSE_GRANULE = 8 * _LANE  # tile_n multiple enabling the lane-dense tail/output


def _round_up(x, m):
    return (x + m - 1) // m * m


def _vmem_capacity_bytes():
    """Physical per-core VMEM (generation aware); conservative fallback."""
    try:
        return int(pltpu.get_tpu_info().vmem_capacity_bytes)
    except Exception:
        return 64 * 1024 * 1024  # v7x per-TensorCore: smallest current generation


def _int_pow(x, g):
    """x**g for non-negative integer g via square-and-multiply (VPU only).

    Returns None for g == 0 (caller treats None as the constant 1.0), so
    gamma=2 costs exactly one multiply and no ones() materialisation.
    """
    if g == 0:
        return None
    acc, base, e = None, x, g
    while e:
        if e & 1:
            acc = base if acc is None else acc * base
        e >>= 1
        if e:
            base = base * base
    return acc


def _focal_loss_kernel(logits_ref, tgt_ref, out_ref, *, alpha, gamma, dense_rows):
    # logits_ref: (tile_n, C) in native dtype (f32/bf16); all math in f32.
    x = logits_ref[...].astype(jnp.float32)                    # (tn, C)
    t = tgt_ref[...]                                            # (tn, 1) int32

    # Row-wise reductions over the class (lane) axis: stable log-sum-exp pieces
    # and the target logit gathered via a one-hot select + lane reduce.
    m = jnp.max(x, axis=-1, keepdims=True)                      # (tn, 1)
    xm = x - m
    e = jnp.exp(xm)
    sum_exp = jnp.sum(e, axis=-1, keepdims=True)                # (tn, 1)
    cls = lax.broadcasted_iota(jnp.int32, x.shape, 1)            # (tn, C)
    d = jnp.sum(jnp.where(cls == t, xm, 0.0), axis=-1, keepdims=True)  # tgt_logit - m

    # ---- per-row scalar tail -----------------------------------------------
    # The (tn, 1) columns use 1/128 lanes, so each tail op would cost as many
    # vreg passes as a full-tile op.  When tile_n % (8*128) == 0 we relayout the
    # two per-row stats to a lane-dense (tn//128, 128) shape (XLU relayout,
    # separate issue slot) so the tail and the output store run at full lane
    # utilisation.  Computing pt = exp(-ce) on the lane-dense shape is cheaper
    # than an extra full-tile one-hot select + reduce for exp(tgt_logit - m).
    if dense_rows is not None:
        sum_exp = sum_exp.reshape(dense_rows, _LANE)
        d = d.reshape(dense_rows, _LANE)

    ce = jnp.log(sum_exp) - d                                    # cross-entropy
    pt = jnp.exp(-ce)
    # Clamp: ce can round to a tiny negative -> pt > 1 -> a negative base would
    # NaN under a float-exponent pow.
    one_minus_pt = jnp.maximum(1.0 - pt, 0.0)

    g = float(gamma)
    if g == int(g) and 0 <= int(g) <= 32:
        w = _int_pow(one_minus_pt, int(g))                       # VPU multiplies only
    else:
        w = one_minus_pt ** jnp.float32(g)

    focal = ce if w is None else w * ce
    if float(alpha) != 1.0:
        focal = jnp.float32(alpha) * focal

    # Rows of a ragged last tile beyond N are independent garbage and are
    # either clipped on write-back (column path) or sliced off in the wrapper
    # (dense path), so no masking pass is needed.
    out_ref[...] = focal


def focal_loss(logits, targets, *, alpha=1.0, gamma=2.0, reduction="mean",
               tile_n=None):
    """Focal loss matching the PyTorch FocalLoss module.

    logits: (N, C) float (f32/bf16 fed natively), targets: (N,) int.
    reduction: 'mean' (default), 'sum', or 'none'.
    """
    n, c = logits.shape
    itemsize = jnp.dtype(logits.dtype).itemsize
    sub = _SUBLANE.get(itemsize, 8)
    vmem_cap = _vmem_capacity_bytes()

    if tile_n is None:
        # Target ~8 MiB per logits block, but never let the two double-buffered
        # logits blocks exceed ~40% of physical VMEM (v7x: 64 MiB per core).
        blk_budget = min(8 * 1024 * 1024, (vmem_cap * 2) // 5 // 2)
        rows_fit = blk_budget // (c * itemsize)
        # Use the lane-dense granule only when it fits and yields >= 2 tiles.
        if rows_fit >= _DENSE_GRANULE and n >= 2 * _DENSE_GRANULE:
            granule = _DENSE_GRANULE
        else:
            granule = sub
        t = max(granule, rows_fit // granule * granule)
        t = min(t, _round_up(n, granule))
        # Keep >= 2 grid steps (double-buffering + megacore / both v7x cores);
        # prefer >= 4 while blocks stay >= ~1 MiB.
        t = min(t, max(granule, _round_up(pl.cdiv(n, 2), granule)))
        quarter = max(granule, _round_up(pl.cdiv(n, 4), granule))
        if quarter * c * itemsize >= (1 << 20):
            t = min(t, quarter)
        tile_n = t
    else:
        assert tile_n % sub == 0, f"tile_n must be a multiple of {sub}"

    blk_logits = tile_n * c * itemsize
    blk_tgt = tile_n * 4
    blk_out = tile_n * 4
    need = 2 * (blk_logits + blk_tgt + blk_out)  # double-buffered blocks
    if need + (8 << 20) > vmem_cap:
        # TODO(synk): add a class-axis grid split with a two-pass / online
        # logsumexp for very large C instead of refusing.
        raise ValueError(
            f"num_classes={c} needs ~{need / 2**20:.1f} MiB of double-buffered "
            f"VMEM blocks (> {vmem_cap / 2**20:.0f} MiB physical VMEM); "
            "class-axis tiling is not implemented.")

    vmem_limit = max(need + (4 << 20), 16 << 20)
    vmem_limit = min(vmem_limit, vmem_cap - (4 << 20))

    grid = pl.cdiv(n, tile_n)
    dense = (tile_n % _DENSE_GRANULE == 0)
    dense_rows = tile_n // _LANE if dense else None

    tgt2d = targets.astype(jnp.int32).reshape(n, 1)
    kernel = functools.partial(_focal_loss_kernel, alpha=float(alpha),
                               gamma=float(gamma), dense_rows=dense_rows)

    if dense:
        # Lane-dense output: each grid step writes a (tile_n//128, 128) slab.
        out_shape = jax.ShapeDtypeStruct((grid * dense_rows, _LANE), jnp.float32)
        out_spec = pl.BlockSpec((dense_rows, _LANE), lambda i: (i, 0))
    else:
        out_shape = jax.ShapeDtypeStruct((n, 1), jnp.float32)
        out_spec = pl.BlockSpec((tile_n, 1), lambda i: (i, 0))

    cost = pl.CostEstimate(
        flops=6 * n * c,
        transcendentals=n * c + 2 * n,
        bytes_accessed=n * c * itemsize + 8 * n)

    out = pl.pallas_call(
        kernel,
        out_shape=out_shape,
        grid_spec=pltpu.PrefetchScalarGridSpec(
            num_scalar_prefetch=0,
            grid=(grid,),
            in_specs=[
                pl.BlockSpec((tile_n, c), lambda i: (i, 0)),
                pl.BlockSpec((tile_n, 1), lambda i: (i, 0)),
            ],
            out_specs=out_spec,
        ),
        compiler_params=pltpu.CompilerParams(
            dimension_semantics=("parallel",),
            vmem_limit_bytes=int(vmem_limit)),
        cost_estimate=cost,
    )(logits, tgt2d)

    per_sample = out.reshape(-1)[:n] if dense else out[:, 0]

    if reduction == "mean":
        return jnp.mean(per_sample)
    if reduction == "sum":
        return jnp.sum(per_sample)
    return per_sample


def _focal_loss_ref(logits, targets, alpha=1.0, gamma=2.0, reduction="mean"):
    logits = logits.astype(jnp.float32)
    lse = jax.nn.logsumexp(logits, axis=-1)
    tgt_logit = jnp.take_along_axis(
        logits, targets[:, None].astype(jnp.int32), axis=-1)[:, 0]
    ce = lse - tgt_logit
    pt = jnp.exp(-ce)
    fl = alpha * (1.0 - pt) ** gamma * ce
    if reduction == "mean":
        return jnp.mean(fl)
    if reduction == "sum":
        return jnp.sum(fl)
    return fl


if __name__ == "__main__":
    key = jax.random.PRNGKey(0)
    k1, k2, k3, k4, k5, k6 = jax.random.split(key, 6)

    # Test 1: small shapes (column fallback path), mean / sum / none reductions.
    N1, C1 = 32, 8
    l1 = jax.random.normal(k1, (N1, C1), dtype=jnp.float32)
    t1 = jax.random.randint(k2, (N1,), 0, C1, dtype=jnp.int32)
    out1 = jax.block_until_ready(focal_loss(l1, t1, alpha=1.0, gamma=2.0))
    ref1 = _focal_loss_ref(l1, t1, alpha=1.0, gamma=2.0)
    assert jnp.allclose(out1, ref1, rtol=1e-5, atol=1e-6), (out1, ref1)
    out1s = jax.block_until_ready(focal_loss(l1, t1, reduction="sum"))
    assert jnp.allclose(out1s, _focal_loss_ref(l1, t1, reduction="sum"),
                        rtol=1e-5, atol=1e-5)
    out1n = jax.block_until_ready(focal_loss(l1, t1, reduction="none"))
    assert jnp.allclose(out1n, _focal_loss_ref(l1, t1, reduction="none"),
                        rtol=1e-5, atol=1e-6)

    # Test 2: lane-dense path with a ragged last tile and non-unit alpha.
    N2, C2 = 2500, 128
    l2 = jax.random.normal(k3, (N2, C2), dtype=jnp.float32)
    t2 = jax.random.randint(k4, (N2,), 0, C2, dtype=jnp.int32)
    out2 = jax.block_until_ready(focal_loss(l2, t2, alpha=0.25, gamma=2.0))
    ref2 = _focal_loss_ref(l2, t2, alpha=0.25, gamma=2.0)
    assert jnp.allclose(out2, ref2, rtol=1e-5, atol=1e-6), (out2, ref2)

    # Test 3: native bf16 logits fed straight to the kernel (lane-dense path).
    N3, C3 = 2048, 128
    l3 = jax.random.normal(k5, (N3, C3), dtype=jnp.float32).astype(jnp.bfloat16)
    t3 = jax.random.randint(k6, (N3,), 0, C3, dtype=jnp.int32)
    out3 = jax.block_until_ready(focal_loss(l3, t3, alpha=1.0, gamma=2.0))
    ref3 = _focal_loss_ref(l3.astype(jnp.float32), t3, alpha=1.0, gamma=2.0)
    assert jnp.allclose(out3, ref3, rtol=1e-4, atol=1e-5), (out3, ref3)

    # Test 4: explicit (column-path) tile size on a ragged batch, gamma=3.
    N4 = 200
    l4 = jax.random.normal(jax.random.PRNGKey(1), (N4, C2), dtype=jnp.float32)
    t4 = jax.random.randint(jax.random.PRNGKey(2), (N4,), 0, C2, dtype=jnp.int32)
    out4 = jax.block_until_ready(focal_loss(l4, t4, alpha=0.5, gamma=3.0, tile_n=64))
    ref4 = _focal_loss_ref(l4, t4, alpha=0.5, gamma=3.0)
    assert jnp.allclose(out4, ref4, rtol=1e-5, atol=1e-6), (out4, ref4)

    print("KERNEL_OK")
</pallas_src>

<mosaic_0001>
module attributes {stable_mosaic.version = 11 : i64} {
  func.func @_focal_loss_kernel(%arg0: i32, %arg1: memref<16x8xf32, #tpu.memory_space<vmem>>, %arg2: memref<16x1xi32, #tpu.memory_space<vmem>>, %arg3: memref<16x1xf32, #tpu.memory_space<vmem>>) attributes {dimension_semantics = [#tpu.dimension_semantics<parallel>], iteration_bounds = array<i64: 2>, scalar_prefetch = 0 : i64, scratch_operands = 0 : i64, tpu.core_type = #tpu.core_type<tc>, window_params = [{transform_indices = @transform_0, window_bounds = array<i64: 16, 8>}, {transform_indices = @transform_1, window_bounds = array<i64: 16, 1>}, {transform_indices = @transform_2, window_bounds = array<i64: 16, 1>}]} {
    %c0 = arith.constant 0 : index
    %c0_0 = arith.constant 0 : index
    %0 = vector.load %arg1[%c0, %c0_0] : memref<16x8xf32, #tpu.memory_space<vmem>>, vector<16x8xf32>
    %c0_1 = arith.constant 0 : index
    %c0_2 = arith.constant 0 : index
    %1 = vector.load %arg2[%c0_1, %c0_2] : memref<16x1xi32, #tpu.memory_space<vmem>>, vector<16x1xi32>
    %cst = arith.constant dense<0xFF800000> : vector<16xf32>
    %2 = vector.multi_reduction <maximumf>, %0, %cst [1] : vector<16x8xf32> to vector<16xf32>
    %3 = vector.shape_cast %2 : vector<16xf32> to vector<16x1xf32>
    %4 = vector.broadcast %3 : vector<16x1xf32> to vector<16x8xf32>
    %5 = arith.subf %0, %4 : vector<16x8xf32>
    %6 = math.exp %5 : vector<16x8xf32>
    %cst_3 = arith.constant dense<0.000000e+00> : vector<16xf32>
    %7 = vector.multi_reduction <add>, %6, %cst_3 [1] : vector<16x8xf32> to vector<16xf32>
    %8 = vector.shape_cast %7 : vector<16xf32> to vector<16x1xf32>
    %9 = tpu.iota {dimensions = array<i32: 1>} : vector<16x8xi32>
    %10 = vector.broadcast %1 : vector<16x1xi32> to vector<16x8xi32>
    %11 = arith.cmpi eq, %9, %10 : vector<16x8xi32>
    %cst_4 = arith.constant 0.000000e+00 : f32
    %12 = vector.broadcast %cst_4 : f32 to vector<16x8xf32>
    %13 = arith.select %11, %5, %12 : vector<16x8xi1>, vector<16x8xf32>
    %cst_5 = arith.constant dense<0.000000e+00> : vector<16xf32>
    %14 = vector.multi_reduction <add>, %13, %cst_5 [1] : vector<16x8xf32> to vector<16xf32>
    %15 = vector.shape_cast %14 : vector<16xf32> to vector<16x1xf32>
    %16 = math.log %8 : vector<16x1xf32>
    %17 = arith.subf %16, %15 : vector<16x1xf32>
    %cst_6 = arith.constant 0.000000e+00 : f32
    %18 = vector.broadcast %cst_6 : f32 to vector<16x1xf32>
    %19 = arith.subf %18, %17 : vector<16x1xf32>
    %20 = math.exp %19 : vector<16x1xf32>
    %cst_7 = arith.constant 1.000000e+00 : f32
    %21 = vector.broadcast %cst_7 : f32 to vector<16x1xf32>
    %22 = arith.subf %21, %20 : vector<16x1xf32>
    %cst_8 = arith.constant 0.000000e+00 : f32
    %23 = vector.broadcast %cst_8 : f32 to vector<16x1xf32>
    %24 = arith.maximumf %22, %23 : vector<16x1xf32>
    %25 = arith.mulf %24, %24 : vector<16x1xf32>
    %26 = arith.mulf %25, %17 : vector<16x1xf32>
    %c0_9 = arith.constant 0 : index
    %c0_10 = arith.constant 0 : index
    %27 = vector.load %arg3[%c0_9, %c0_10] : memref<16x1xf32, #tpu.memory_space<vmem>>, vector<16x1xf32>
    tpu.vector_store %arg3[%c0_9, %c0_10], %26 {strides = array<i32>} : memref<16x1xf32, #tpu.memory_space<vmem>>, vector<16x1xf32>,
    return
  }
  func.func @transform_0(%arg0: i32) -> (i32, i32) {
    %c0_i32 = arith.constant 0 : i32
    %c0_i32_0 = arith.constant 0 : i32
    return %arg0, %c0_i32 : i32, i32
  }
  func.func @transform_1(%arg0: i32) -> (i32, i32) {
    %c0_i32 = arith.constant 0 : i32
    %c0_i32_0 = arith.constant 0 : i32
    return %arg0, %c0_i32 : i32, i32
  }
  func.func @transform_2(%arg0: i32) -> (i32, i32) {
    %c0_i32 = arith.constant 0 : i32
    %c0_i32_0 = arith.constant 0 : i32
    return %arg0, %c0_i32 : i32, i32
  }
}

</mosaic_0001>

<llo_original>
// kernel: tpu_custom_call.1
$region0: #{tpu_custom_call.1}
  #allocation0 [shape = 'u32[]', space=smem, size = 0x4, offset = 0x4, fixed_abs, tag = 'smem constant byte address 0x4 - core index']
  #allocation1 [shape = 'u32[144,128]{1,0:T(1,128)}', space=vmem, size = 0x12000, scoped, tag = 'internal scratch']
  %s0 = inlined_call_operand.vmem [shape: f32[32,8], index: 0, kind: input, shape index: {}]
  %s1 = inlined_call_operand.vmem [shape: s32[32,1], index: 1, kind: input, shape index: {}]
  %s2 = inlined_call_operand.vmem [shape: f32[32,1], index: 2, kind: output, shape index: {}]
  %s3 = sld [smem:[#allocation0]]
  $region41: #{tpu_custom_call.1} parent=0
    _
  %s5 = ssub.s32 1, %s3
  %s6 = scalar_select 0, %s5, %s3
  loop: start=0, step=1, limit=4
  $region2: #{tpu_custom_call.1} parent=0 // loop_pre_header
    _
  $region3: #{tpu_custom_call.1} parent=0 // loop_header
    %s8 = sphi 0, %s12
    %p9 = scmp.ge.s32.totalorder %s8, 4
    %s18 = sphi 0, %s20
    %s21 = sphi 0, %s18
    %s22 = sphi 0, %s21
    %s38 = sphi 0, %s22
    %s44 = sphi 0, %s46
    %s47 = sphi 0, %s44
    %s48 = sphi 0, %s47
    %s64 = sphi 0, %s48
    %s70 = sphi 0, %s72
    %s73 = sphi 0, %s70
    %s74 = sphi 0, %s73
    %s90 = sphi 0, %s74
  $region4: #{tpu_custom_call.1} parent=0 // loop_header_branch
    %11 = sbr.rel (%p9) target = $region8
  $region5: #{tpu_custom_call.1} parent=0 // loop_body
    %s13 = ssub.s32 %s8, 1
    %s14 = ssub.s32 %s8, 2
    %s15 = sadd.s32 %s8, 1
    %s16 = ssub.s32 %s8, %s15
    %p17 = scmp.eq.s32.totalorder %s16, 0
    %s19 = sadd.s32 %s18, 1
    %s20 = scalar_select %p17, %s18, %s19
    %p23 = pneg %p17
    %p24 = scmp.eq.s32.totalorder %s8, 1
    %p25 = por %p23, %p24
    %p26 = scmp.ne.s32.totalorder %s18, %s21
    %p27 = scmp.eq.s32.totalorder %s8, 0
    %p28 = por %p26, %p27
    %p29 = scmp.ne.s32.totalorder %s18, %s21
    %p30 = scmp.eq.s32.totalorder %s13, 1
    %p31 = por %p29, %p30
    %p32 = scmp.ne.s32.totalorder %s21, %s22
    %p33 = scmp.eq.s32.totalorder %s13, 0
    %p34 = por %p32, %p33
    %p35 = scmp.ne.s32.totalorder %s21, %s22
    %p36 = scmp.eq.s32.totalorder %s14, 1
    %p37 = por %p35, %p36
    %p39 = scmp.ne.s32.totalorder %s22, %s38
    %p40 = scmp.eq.s32.totalorder %s14, 0
    %p41 = por %p39, %p40
    %s42 = ssub.s32 %s8, %s15
    %p43 = scmp.eq.s32.totalorder %s42, 0
    %s45 = sadd.s32 %s44, 1
    %s46 = scalar_select %p43, %s44, %s45
    %p49 = pneg %p43
    %p50 = scmp.eq.s32.totalorder %s8, 1
    %p51 = por %p49, %p50
    %p52 = scmp.ne.s32.totalorder %s44, %s47
    %p53 = scmp.eq.s32.totalorder %s8, 0
    %p54 = por %p52, %p53
    %p55 = scmp.ne.s32.totalorder %s44, %s47
    %p56 = scmp.eq.s32.totalorder %s13, 1
    %p57 = por %p55, %p56
    %p58 = scmp.ne.s32.totalorder %s47, %s48
    %p59 = scmp.eq.s32.totalorder %s13, 0
    %p60 = por %p58, %p59
    %p61 = scmp.ne.s32.totalorder %s47, %s48
    %p62 = scmp.eq.s32.totalorder %s14, 1
    %p63 = por %p61, %p62
    %p65 = scmp.ne.s32.totalorder %s48, %s64
    %p66 = scmp.eq.s32.totalorder %s14, 0
    %p67 = por %p65, %p66
    %s68 = ssub.s32 %s8, %s15
    %p69 = scmp.eq.s32.totalorder %s68, 0
    %s71 = sadd.s32 %s70, 1
    %s72 = scalar_select %p69, %s70, %s71
    %p75 = pneg %p69
    %p76 = scmp.eq.s32.totalorder %s8, 1
    %p77 = por %p75, %p76
    %p78 = scmp.ne.s32.totalorder %s70, %s73
    %p79 = scmp.eq.s32.totalorder %s8, 0
    %p80 = por %p78, %p79
    %p81 = scmp.ne.s32.totalorder %s70, %s73
    %p82 = scmp.eq.s32.totalorder %s13, 1
    %p83 = por %p81, %p82
    %p84 = scmp.ne.s32.totalorder %s73, %s74
    %p85 = scmp.eq.s32.totalorder %s13, 0
    %p86 = por %p84, %p85
    %p87 = scmp.ne.s32.totalorder %s73, %s74
    %p88 = scmp.eq.s32.totalorder %s14, 1
    %p89 = por %p87, %p88
    %p91 = scmp.ne.s32.totalorder %s74, %s90
    %p92 = scmp.eq.s32.totalorder %s14, 0
    %p93 = por %p91, %p92
    %p94 = scmp.le.s32.totalorder 1, %s8
    %p95 = scmp.lt.s32.totalorder %s8, 3
    %p96 = pnand %p94, %p95
    %p97 = pneg %p96
    // Predicated region
    $region9: #{tpu_custom_call.1} parent=5 // pred_check
      _
    $region10: #{tpu_custom_call.1} parent=5 // pred_check_branch
      %99 = sbr.rel (%p96) target = $region12
    $region11: #{tpu_custom_call.1} parent=5 // pred_region
      %s100 = ssub.s32 %s8, 1
    $region12: #{tpu_custom_call.1} parent=5 // pred_fallthru
      _
    %p101 = scmp.lt.s32.totalorder %s8, 2
    // Predicated region
    $region13: #{tpu_custom_call.1} parent=5 // pred_check
      %p102 = pneg %p101
    $region14: #{tpu_custom_call.1} parent=5 // pred_check_branch
      %104 = sbr.rel (%p102) target = $region16
    $region15: #{tpu_custom_call.1} parent=5 // pred_region
      // Predicated region
      $region17: #{tpu_custom_call.1} parent=15 // pred_check
        %p105 = pneg %p28
      $region18: #{tpu_custom_call.1} parent=15 // pred_check_branch
        %107 = sbr.rel (%p105) target = $region20
      $region19: #{tpu_custom_call.1} parent=15 // pred_region
        %s108 = smul.u32 2, %s8
        %p109 = scmp.lt.s32.totalorder %s108, 3
        %s110 = scalar_select %p109, %s108, 3
        %s111 = smul.addr %s110, 8
        %s112 = scalar_lea.vmem %s0, %s111
        %s113 = smul.u32 2, %s8
      $region20: #{tpu_custom_call.1} parent=15 // pred_fallthru
        _
      // Predicated region
      $region21: #{tpu_custom_call.1} parent=15 // pred_check
        %p114 = pneg %p54
      $region22: #{tpu_custom_call.1} parent=15 // pred_check_branch
        %116 = sbr.rel (%p114) target = $region24
      $region23: #{tpu_custom_call.1} parent=15 // pred_region
        %s117 = smul.u32 2, %s8
        %p118 = scmp.lt.s32.totalorder %s117, 3
        %s119 = scalar_select %p118, %s117, 3
        %s120 = smul.addr %s119, 8
        %s121 = scalar_lea.vmem %s1, %s120
        %s122 = smul.u32 2, %s8
      $region24: #{tpu_custom_call.1} parent=15 // pred_fallthru
        _
    $region16: #{tpu_custom_call.1} parent=5 // pred_fallthru
      _
    %p123 = scmp.le.s32.totalorder 1, %s8
    %p124 = scmp.lt.s32.totalorder %s8, 3
    %p125 = pnand %p123, %p124
    %p126 = pneg %p125
    // Predicated region
    $region25: #{tpu_custom_call.1} parent=5 // pred_check
      _
    $region26: #{tpu_custom_call.1} parent=5 // pred_check_branch
      %128 = sbr.rel (%p125) target = $region28
    $region27: #{tpu_custom_call.1} parent=5 // pred_region
      %s129 = ssub.s32 %s8, 1
      %s130 = smul.u32 2, %s13
      %p131 = scmp.lt.s32.totalorder %s130, 3
      %s132 = scalar_select %p131, %s130, 3
      %s133 = smul.addr %s132, 8
      %s134 = scalar_lea.vmem %s0, %s133
      %p135 = pneg %p34
      %p136 = pneg %p31
      %s137 = smul.u32 2, %s13
      %p138 = scmp.lt.s32.totalorder %s137, 3
      %s139 = scalar_select %p138, %s137, 3
      %s140 = smul.addr %s139, 8
      %s141 = scalar_lea.vmem %s1, %s140
      %p142 = pneg %p60
      %p143 = pneg %p57
      %p144 = pneg %p86
      %p145 = pneg %p83
      %s146 = smul.u32 2, %s13
      %p147 = scmp.lt.s32.totalorder %s146, 3
      %s148 = scalar_select %p147, %s146, 3
      %s149 = smul.addr %s148, 8
      %s150 = scalar_lea.vmem %s2, %s149
      %s151 = smul.u32 2, %s13
      %p152 = scmp.lt.s32.totalorder %s151, 3
      %s153 = scalar_select %p152, %s151, 3
      %s154 = smul.addr %s153, 8
      %s155 = scalar_lea.vmem %s0, %s154
      %s156 = smul.u32 2, %s13
      %s157 = smul.u32 2, %s13
      %p158 = scmp.lt.s32.totalorder %s157, 3
      %s159 = scalar_select %p158, %s157, 3
      %s160 = smul.addr %s159, 8
      %s161 = scalar_lea.vmem %s1, %s160
      %s162 = smul.u32 2, %s13
      %s163 = smul.u32 2, %s13
      %p164 = scmp.lt.s32.totalorder %s163, 3
      %s165 = scalar_select %p164, %s163, 3
      %s166 = smul.addr %s165, 8
      %s167 = scalar_lea.vmem %s2, %s166
      %s168 = smul.u32 2, %s13
      %v169 = vld [vmem:[%s155] sm:$0xff]
      %v170 = vld [vmem:[%s155 + $0x8] sm:$0xff]
      %v171 = vld [vmem:[%s161] sm:$0xff]
      %v172 = vld [vmem:[%s161 + $0x8] sm:$0xff]
      %vm173 = vcmask 64512
      %v174 = vsel %vm173, %v169, -inf
      %175 = vmax.xlane.f32.xlu0 %v174
      %v176 = vpop.xlane.xlu0 %175
      %v177 = vsel %vm173, %v170, -inf
      %178 = vmax.xlane.f32.xlu0 %v177
      %v179 = vpop.xlane.xlu0 %178
      %v180 = vsub.f32 %v169, %v176
      %v181 = vsub.f32 %v170, %v179
      %v182 = vmul.f32 %v180, 1.442695
      %v183 = vpow.pop %v182
      %v184 = vmul.f32 %v181, 1.442695
      %v185 = vpow.pop %v184
      %v186 = vsel %vm173, %v183, 0.0
      %187 = vadd.xlane.f32.xlu0 %v186
      %v188 = vpop.xlane.xlu0 %187
      %v189 = vsel %vm173, %v185, 0.0
      %190 = vadd.xlane.f32.xlu0 %v189
      %v191 = vpop.xlane.xlu0 %190
      %v192 = vlaneseq
      %v193 = vand.u32 %v192, 127
      %194 = vset.pattern.permute.xlu0 0
      %195 = vperm.xlu0 %194, %v171
      %v196 = vpop.permute.xlu0 %195
      %197 = vset.pattern.permute.xlu0 0
      %198 = vperm.xlu0 %197, %v172
      %v199 = vpop.permute.xlu0 %198
      %vm200 = vcmp.eq.s32.totalorder %v193, %v196
      %vm201 = vcmp.eq.s32.totalorder %v193, %v199
      %v202 = vsel %vm200, %v180, 0.0
      %v203 = vsel %vm201, %v181, 0.0
      %v204 = vsel %vm173, %v202, 0.0
      %205 = vadd.xlane.f32.xlu0 %v204
      %v206 = vpop.xlane.xlu0 %205
      %v207 = vsel %vm173, %v203, 0.0
      %208 = vadd.xlane.f32.xlu0 %v207
      %v209 = vpop.xlane.xlu0 %208
      %v210 = vlog2.pop %v188
      %v211 = vmul.f32 %v210, 0.6931472
      %v212 = vlog2.pop %v191
      %v213 = vmul.f32 %v212, 0.6931472
      %v214 = vsub.f32 %v211, %v206
      %v215 = vsub.f32 %v213, %v209
      %v216 = vsub.f32 0.0, %v214
      %v217 = vsub.f32 0.0, %v215
      %v218 = vmul.f32 %v216, 1.442695
      %v219 = vpow.pop %v218
      %v220 = vmul.f32 %v217, 1.442695
      %v221 = vpow.pop %v220
      %v222 = vsub.f32 1.0, %v219
      %v223 = vsub.f32 1.0, %v221
      %v224 = vmax.f32 %v222, 0.0
      %v225 = vmax.f32 %v223, 0.0
      %v226 = vmul.f32 %v224, %v224
      %v227 = vmul.f32 %v225, %v225
      %v228 = vmul.f32 %v226, %v214
      %v229 = vmul.f32 %v227, %v215
      %vm230 = vcmask 7168
      %231 = vst.msk [vmem:[%s167] sm:$0xff] %vm230, %v228
      %232 = vst.msk [vmem:[%s167 + $0x8] sm:$0xff] %vm230, %v229
      %s233 = smul.u32 2, %s13
      %p234 = scmp.lt.s32.totalorder %s233, 3
      %s235 = scalar_select %p234, %s233, 3
      %s236 = smul.addr %s235, 8
      %s237 = scalar_lea.vmem %s2, %s236
      // Predicated region
      $region29: #{tpu_custom_call.1} parent=27 // pred_check
        %p238 = pneg %p83
      $region30: #{tpu_custom_call.1} parent=27 // pred_check_branch
        %240 = sbr.rel (%p238) target = $region32
      $region31: #{tpu_custom_call.1} parent=27 // pred_region
        %s241 = smul.u32 2, %s13
      $region32: #{tpu_custom_call.1} parent=27 // pred_fallthru
        _
    $region28: #{tpu_custom_call.1} parent=5 // pred_fallthru
      _
    %p242 = scmp.le.s32.totalorder 2, %s8
    // Predicated region
    $region33: #{tpu_custom_call.1} parent=5 // pred_check
      %p243 = pneg %p242
    $region34: #{tpu_custom_call.1} parent=5 // pred_check_branch
      %245 = sbr.rel (%p243) target = $region36
    $region35: #{tpu_custom_call.1} parent=5 // pred_region
      %s246 = ssub.s32 %s8, 2
      // Predicated region
      $region37: #{tpu_custom_call.1} parent=35 // pred_check
        %p247 = pneg %p89
      $region38: #{tpu_custom_call.1} parent=35 // pred_check_branch
        %249 = sbr.rel (%p247) target = $region40
      $region39: #{tpu_custom_call.1} parent=35 // pred_region
        %s250 = smul.u32 2, %s14
        %p251 = scmp.lt.s32.totalorder %s250, 3
        %s252 = scalar_select %p251, %s250, 3
        %s253 = smul.addr %s252, 8
        %s254 = scalar_lea.vmem %s2, %s253
      $region40: #{tpu_custom_call.1} parent=35 // pred_fallthru
        _
    $region36: #{tpu_custom_call.1} parent=5 // pred_fallthru
      _
  $region6: #{tpu_custom_call.1} parent=0 // loop_footer
    %s12 = sadd.s32 1, %s8
  $region7: #{tpu_custom_call.1} parent=0 // loop_footer_branch
    %7 = sbr.rel target = $region3
  $region8: #{tpu_custom_call.1} parent=0 // loop_exit
    _

</llo_original>
